<compile_context>
chip_gen: v5e
topology: v5e:2x2
jax: 0.10.0
libtpu: 0.0.40
codegen_flags: <defaults>
</compile_context>

<pallas_src>
import functools

import jax
import jax.numpy as jnp
from jax.experimental import pallas as pl
from jax.experimental.pallas import tpu as pltpu


def _round_up(x, m):
    return ((x + m - 1) // m) * m


def _sublane(dtype):
    itemsize = jnp.dtype(dtype).itemsize
    return max(8, 32 // max(itemsize, 1))   # 8 f32 / 16 bf16 / 32 int8-fp8


def _vmem_capacity_bytes():
    try:
        info = pltpu.get_tpu_info()
        cap = getattr(info, "vmem_capacity_bytes", None)
        if cap:
            return int(cap)
    except Exception:
        pass
    return 64 * 1024 * 1024   # safe lower bound (v7x per-TensorCore VMEM)


def _highway_kernel(x_ref, w_ref, b_ref, o_ref, *, d, split_proj, resident):
    """One (TM, D) row tile; one highway layer per grid step along axis 1.

    x_ref : (TM, D)   input rows (consumed at layer 0 only)
    w_ref : (L, D, 2D) if resident else (1, D, 2D); columns [W_nl | W_gate],
            already transposed so the kernel computes x @ W.
    b_ref : (L, 1, 2D) if resident else (1, 1, 2D)
    o_ref : (TM, D)   output tile; doubles as the VMEM-resident activation
            carry across layers (constant output block index on the layer axis).
    """
    layer = pl.program_id(1)

    @pl.when(layer == 0)
    def _():
        o_ref[...] = x_ref[...]

    x = o_ref[...]                                   # current activation (native dtype)
    li = layer if resident else 0
    w = w_ref[li]                                    # (D, 2D)
    b = b_ref[li].astype(jnp.float32)                # (1, 2D)

    # Feed the MXU in the weight dtype (bf16 weights -> bf16 operands, f32 acc).
    x_mat = x if x.dtype == w.dtype else x.astype(w.dtype)

    if split_proj:
        nl = jnp.dot(x_mat, w[:, :d], preferred_element_type=jnp.float32) + b[:, :d]
        gl = jnp.dot(x_mat, w[:, d:], preferred_element_type=jnp.float32) + b[:, d:]
    else:
        proj = jnp.dot(x_mat, w, preferred_element_type=jnp.float32) + b
        nl, gl = proj[:, :d], proj[:, d:]

    nl = jnp.maximum(nl, 0.0)          # ReLU    (VPU)
    gate = jax.nn.sigmoid(gl)          # sigmoid (EUP slot)
    # gate*x + (1-gate)*nl  ==  nl + gate*(x - nl)   (one fewer vmul)
    out = nl + gate * (x.astype(jnp.float32) - nl)
    o_ref[...] = out.astype(o_ref.dtype)


def prepare_highway_params(weights, biases, param_dtype=None):
    """One-time parameter prep (outside the hot forward path).

    weights: list of PyTorch-style (2D, D) Linear weights; biases: list of (2D,).
    Returns w: (L, D, 2D) (transposed, columns = [nonlinear | gate]) and
    b: (L, 1, 2D).  Pass param_dtype=jnp.bfloat16 to halve weight HBM/VMEM
    traffic and hit MXU bf16 peak (accumulation stays f32 in-kernel).
    """
    d = weights[0].shape[1]
    w = jnp.stack([jnp.transpose(wt) for wt in weights])       # (L, D, 2D)
    b = jnp.stack([bi.reshape(1, 2 * d) for bi in biases])     # (L, 1, 2D)
    if param_dtype is not None:
        w = w.astype(param_dtype)
        b = b.astype(param_dtype)
    return w, b


def highway_forward(inputs, w, b, *, tile_rows=None):
    """HighWay.forward. inputs: (..., D); (w, b) from prepare_highway_params."""
    orig_shape = inputs.shape
    d = orig_shape[-1]
    num_layers = w.shape[0]
    x2d = inputs.reshape(-1, d)
    n = x2d.shape[0]

    act_bytes = jnp.dtype(inputs.dtype).itemsize
    w_bytes = jnp.dtype(w.dtype).itemsize
    sub = _sublane(inputs.dtype)

    vmem_cap = _vmem_capacity_bytes()
    usable = int(vmem_cap * 0.85)          # leave headroom for compiler scratch
    if tile_rows is None:
        # Bigger row tiles on 128 MiB parts (v5e/v6e), smaller default on v7x.
        tile_rows = 1024 if vmem_cap >= 96 * 1024 * 1024 else 512

    def vmem_est(tm, resident):
        tiles = 4 * tm * d * act_bytes                       # x + out, double-buffered
        temps = 6 * tm * d * 4                               # live f32 intermediates
        if resident:
            wmem = 2 * num_layers * 2 * d * d * w_bytes      # conservative: 2 buffers
            bmem = 2 * num_layers * 2 * d * w_bytes
        else:
            wmem = 2 * 2 * d * d * w_bytes                   # per-layer block, dbl-buffered
            bmem = 2 * 2 * d * w_bytes
        return tiles + temps + wmem + bmem + (2 << 20)       # +2 MiB slack

    tm = max(sub, min(_round_up(tile_rows, sub), _round_up(n, sub)))
    # Prefer full weight residency (biggest HBM-traffic win) as long as it fits
    # alongside the smallest usable row tile; then pick the largest TM that fits.
    resident = vmem_est(sub, True) <= usable
    while vmem_est(tm, resident) > usable and tm > sub:
        tm = max(sub, _round_up(tm // 2, sub))

    n_pad = _round_up(n, tm)
    if n_pad != n:
        x2d = jnp.pad(x2d, ((0, n_pad - n), (0, 0)))

    grid = (n_pad // tm, num_layers)
    split_proj = d >= 256      # two (D,D) matmuls for large D, one (D,2D) otherwise

    if resident:
        w_spec = pl.BlockSpec((num_layers, d, 2 * d), lambda i, l: (0, 0, 0))
        b_spec = pl.BlockSpec((num_layers, 1, 2 * d), lambda i, l: (0, 0, 0))
    else:
        w_spec = pl.BlockSpec((1, d, 2 * d), lambda i, l: (l, 0, 0))
        b_spec = pl.BlockSpec((1, 1, 2 * d), lambda i, l: (l, 0, 0))

    kernel = functools.partial(
        _highway_kernel, d=d, split_proj=split_proj, resident=resident)

    out = pl.pallas_call(
        kernel,
        out_shape=jax.ShapeDtypeStruct((n_pad, d), inputs.dtype),
        grid_spec=pltpu.PrefetchScalarGridSpec(
            num_scalar_prefetch=0,
            grid=grid,
            in_specs=[
                pl.BlockSpec((tm, d), lambda i, l: (i, 0)),   # x rows (fetched once/tile)
                w_spec,
                b_spec,
            ],
            out_specs=pl.BlockSpec((tm, d), lambda i, l: (i, 0)),
        ),
        compiler_params=pltpu.CompilerParams(
            dimension_semantics=("parallel", "arbitrary"),
            vmem_limit_bytes=int(min(usable, vmem_cap)),
        ),
    )(x2d, w, b)

    if n_pad != n:
        out = out[:n]
    return out.reshape(orig_shape)


def highway_reference(inputs, weights, biases):
    """Pure-JAX reference matching the PyTorch module exactly."""
    current = inputs
    for wt, bi in zip(weights, biases):
        proj = current @ wt.T + bi
        d = current.shape[-1]
        nonlinear = jax.nn.relu(proj[..., :d])
        gate = jax.nn.sigmoid(proj[..., d:])
        current = gate * current + (1.0 - gate) * nonlinear
    return current


if __name__ == "__main__":
    # Small deterministic smoke test: batch=2, seq=8, hidden=32, num_layers=2.
    # (Realistic deployments use D >= 512; this tiny D only checks correctness.)
    key = jax.random.PRNGKey(0)
    batch, seq, hidden, num_layers = 2, 8, 32, 2

    k_x, *k_params = jax.random.split(key, 1 + 2 * num_layers)
    x = jax.random.normal(k_x, (batch, seq, hidden), dtype=jnp.float32)

    weights, biases = [], []
    bound = 1.0 / (hidden ** 0.5)    # nn.Linear default init range
    for layer in range(num_layers):
        kw, kb = k_params[2 * layer], k_params[2 * layer + 1]
        weights.append(
            jax.random.uniform(kw, (2 * hidden, hidden), jnp.float32, -bound, bound))
        biases.append(
            jax.random.uniform(kb, (2 * hidden,), jnp.float32, -bound, bound))

    # One-time parameter prep (outside the hot forward path / jit).
    w, b = prepare_highway_params(weights, biases)

    fwd = jax.jit(highway_forward)
    out = jax.block_until_ready(fwd(x, w, b))

    ref = highway_reference(x, weights, biases)
    assert out.shape == x.shape
    assert jnp.allclose(out, ref, atol=1e-5, rtol=1e-5), "mismatch vs reference"

    print("KERNEL_OK")
</pallas_src>

<mosaic_0001>
module attributes {stable_mosaic.version = 11 : i64} {
  func.func @_highway_kernel(%arg0: i32, %arg1: i32, %arg2: memref<16x32xf32, #tpu.memory_space<vmem>>, %arg3: memref<2x32x64xf32, #tpu.memory_space<vmem>>, %arg4: memref<2x1x64xf32, #tpu.memory_space<vmem>>, %arg5: memref<16x32xf32, #tpu.memory_space<vmem>>) attributes {dimension_semantics = [#tpu.dimension_semantics<parallel>, #tpu.dimension_semantics<arbitrary>], iteration_bounds = array<i64: 1, 2>, scalar_prefetch = 0 : i64, scratch_operands = 0 : i64, tpu.core_type = #tpu.core_type<tc>, window_params = [{transform_indices = @transform_0, window_bounds = array<i64: 16, 32>}, {pipeline_mode = #tpu.pipeline_mode<synchronous>, transform_indices = @transform_1, window_bounds = array<i64: 2, 32, 64>}, {pipeline_mode = #tpu.pipeline_mode<synchronous>, transform_indices = @transform_2, window_bounds = array<i64: 2, 1, 64>}, {transform_indices = @transform_3, window_bounds = array<i64: 16, 32>}]} {
    %c0_i32 = arith.constant 0 : i32
    %0 = arith.cmpi eq, %arg1, %c0_i32 : i32
    %1 = arith.extui %0 : i1 to i32
    %c0_i32_0 = arith.constant 0 : i32
    %2 = arith.cmpi ne, %1, %c0_i32_0 : i32
    scf.if %2 {
      %c0_10 = arith.constant 0 : index
      %c0_11 = arith.constant 0 : index
      %26 = vector.load %arg2[%c0_10, %c0_11] : memref<16x32xf32, #tpu.memory_space<vmem>>, vector<16x32xf32>
      %c0_12 = arith.constant 0 : index
      %c0_13 = arith.constant 0 : index
      %27 = vector.load %arg5[%c0_12, %c0_13] : memref<16x32xf32, #tpu.memory_space<vmem>>, vector<16x32xf32>
      tpu.vector_store %arg5[%c0_12, %c0_13], %26 {strides = array<i32>} : memref<16x32xf32, #tpu.memory_space<vmem>>, vector<16x32xf32>,
    } else {
    }
    %c0 = arith.constant 0 : index
    %c0_1 = arith.constant 0 : index
    %3 = vector.load %arg5[%c0, %c0_1] : memref<16x32xf32, #tpu.memory_space<vmem>>, vector<16x32xf32>
    %4 = arith.index_cast %arg1 : i32 to index
    %c0_2 = arith.constant 0 : index
    %c0_3 = arith.constant 0 : index
    %5 = vector.load %arg3[%4, %c0_2, %c0_3] : memref<2x32x64xf32, #tpu.memory_space<vmem>>, vector<1x32x64xf32>
    %6 = vector.shape_cast %5 : vector<1x32x64xf32> to vector<32x64xf32>
    %7 = arith.index_cast %arg1 : i32 to index
    %c0_4 = arith.constant 0 : index
    %c0_5 = arith.constant 0 : index
    %8 = vector.load %arg4[%7, %c0_4, %c0_5] : memref<2x1x64xf32, #tpu.memory_space<vmem>>, vector<1x1x64xf32>
    %9 = vector.shape_cast %8 : vector<1x1x64xf32> to vector<1x64xf32>
    %cst = arith.constant dense<0.000000e+00> : vector<16x64xf32>
    %10 = tpu.matmul %3, %6, %cst {dimension_numbers = #tpu.dot_dimension_numbers<[1], [0], [0], [1], [0, 0, 1, 1], [], []>} : vector<16x32xf32>, vector<32x64xf32>, vector<16x64xf32> -> vector<16x64xf32>
    %11 = vector.broadcast %9 : vector<1x64xf32> to vector<16x64xf32>
    %12 = arith.addf %10, %11 : vector<16x64xf32>
    %13 = vector.extract_strided_slice %12 {offsets = [0, 0], sizes = [16, 32], strides = [1, 1]} : vector<16x64xf32> to vector<16x32xf32>
    %14 = vector.extract_strided_slice %12 {offsets = [0, 32], sizes = [16, 32], strides = [1, 1]} : vector<16x64xf32> to vector<16x32xf32>
    %cst_6 = arith.constant 0.000000e+00 : f32
    %15 = vector.broadcast %cst_6 : f32 to vector<16x32xf32>
    %16 = arith.maximumf %13, %15 : vector<16x32xf32>
    %17 = arith.negf %14 : vector<16x32xf32>
    %18 = math.exp %17 : vector<16x32xf32>
    %cst_7 = arith.constant 1.000000e+00 : f32
    %19 = vector.broadcast %cst_7 : f32 to vector<16x32xf32>
    %20 = arith.addf %19, %18 : vector<16x32xf32>
    %21 = arith.divf %19, %20 : vector<16x32xf32>
    %22 = arith.subf %3, %16 : vector<16x32xf32>
    %23 = arith.mulf %21, %22 : vector<16x32xf32>
    %24 = arith.addf %16, %23 : vector<16x32xf32>
    %c0_8 = arith.constant 0 : index
    %c0_9 = arith.constant 0 : index
    %25 = vector.load %arg5[%c0_8, %c0_9] : memref<16x32xf32, #tpu.memory_space<vmem>>, vector<16x32xf32>
    tpu.vector_store %arg5[%c0_8, %c0_9], %24 {strides = array<i32>} : memref<16x32xf32, #tpu.memory_space<vmem>>, vector<16x32xf32>,
    return
  }
  func.func @transform_0(%arg0: i32, %arg1: i32) -> (i32, i32) {
    %c0_i32 = arith.constant 0 : i32
    %c0_i32_0 = arith.constant 0 : i32
    return %arg0, %c0_i32 : i32, i32
  }
  func.func @transform_1(%arg0: i32, %arg1: i32) -> (i32, i32, i32) {
    %c0_i32 = arith.constant 0 : i32
    %c0_i32_0 = arith.constant 0 : i32
    %c0_i32_1 = arith.constant 0 : i32
    %c0_i32_2 = arith.constant 0 : i32
    return %c0_i32, %c0_i32_0, %c0_i32_1 : i32, i32, i32
  }
  func.func @transform_2(%arg0: i32, %arg1: i32) -> (i32, i32, i32) {
    %c0_i32 = arith.constant 0 : i32
    %c0_i32_0 = arith.constant 0 : i32
    %c0_i32_1 = arith.constant 0 : i32
    %c0_i32_2 = arith.constant 0 : i32
    return %c0_i32, %c0_i32_0, %c0_i32_1 : i32, i32, i32
  }
  func.func @transform_3(%arg0: i32, %arg1: i32) -> (i32, i32) {
    %c0_i32 = arith.constant 0 : i32
    %c0_i32_0 = arith.constant 0 : i32
    return %arg0, %c0_i32 : i32, i32
  }
}

</mosaic_0001>

<llo_original>
// kernel: highway_forward.1
$region0: #{highway_forward.1}
  #allocation0 [shape = 'u32[]', space=smem, size = 0x4, offset = 0x4, fixed_abs, tag = 'smem constant byte address 0x4 - core index']
  #allocation1 [shape = 'u32[72,128]{1,0:T(1,128)}', space=vmem, size = 0x9000, scoped, tag = 'internal scratch']
  %s0 = inlined_call_operand.hbm [shape: f32[16,32], index: 0, kind: input, shape index: {}]
  %s1 = inlined_call_operand.hbm [shape: f32[2,32,64], index: 1, kind: input, shape index: {}]
  %s2 = inlined_call_operand.vmem [shape: f32[2,1,64], index: 2, kind: input, shape index: {}]
  %s3 = inlined_call_operand.hbm [shape: f32[16,32], index: 3, kind: output, shape index: {}]
  %s4 = sld [smem:[#allocation0]]
  $region57: #{highway_forward.1} parent=0
    _
  %s6 = ssub.s32 1, %s4
  %s7 = scalar_select 0, %s6, %s4
  $region1: #{highway_forward.1} parent=0
    #allocation2 [shape = 'u8[8192]{0}', space=vmem, size = 0x2000, scoped, tag = 'input window, operand 0, single buffered']
    #allocation3 [shape = 's32[2]{0}', space=sflag, size = 0x8, scoped, tag = 'scoped memory for highway_forward.1']
    #allocation4 [shape = 's32[2]{0}', space=sflag, size = 0x8, scoped, tag = 'scoped memory for highway_forward.1']
    #allocation5 [shape = 'u8[32768]{0}', space=vmem, size = 0x8000, scoped, tag = 'input window, operand 1, single buffered']
    #allocation6 [shape = 's32[1]{0}', space=sflag, size = 0x4, scoped, tag = 'scoped memory for highway_forward.1']
    #allocation7 [shape = 'u8[8192]{0}', space=vmem, size = 0x2000, scoped, tag = 'output window, operand 0, single buffered']
    %8 = vsyncpa [#allocation3], 0
    %9 = vsyncpa [#allocation6], 0
    %10 = vsyncpa [#allocation4], 0
    loop: start=0, step=1, limit=4
    $region2: #{highway_forward.1} parent=1 // loop_pre_header
      _
    $region3: #{highway_forward.1} parent=1 // loop_header
      %s12 = sphi 0, %s16
      %p13 = scmp.ge.s32.totalorder %s12, 4
      %s19 = sphi 0, %s31
      %s20 = sphi 0, %s27
      %s21 = sphi 0, %s19
      %s22 = sphi 0, %s20
      %s23 = sphi 0, %s21
      %s24 = sphi 0, %s22
      %s34 = sphi 0, %s36
      %s37 = sphi 0, %s34
      %s38 = sphi 0, %s37
      %s54 = sphi 0, %s38
      %s58 = sphi 0, %s58
      %s60 = sphi 0, %s58
      %s61 = sphi 0, %s60
      %s75 = sphi 0, %s61
      %s79 = sphi 0, %s79
      %s81 = sphi 0, %s79
      %s82 = sphi 0, %s81
      %s96 = sphi 0, %s82
      %s102 = sphi 0, %s104
      %s105 = sphi 0, %s102
      %s106 = sphi 0, %s105
      %s122 = sphi 0, %s106
    $region4: #{highway_forward.1} parent=1 // loop_header_branch
      %15 = sbr.rel (%p13) target = $region8
    $region5: #{highway_forward.1} parent=1 // loop_body
      %s17 = ssub.s32 %s12, 1
      %s18 = ssub.s32 %s12, 2
      %s25 = sadd.s32 1, %s20
      %p26 = scmp.ge.s32.totalorder %s25, 2
      %s27 = scalar_select %p26, 0, %s25
      %s28 = sadd.s32 1, %s19
      %s29 = scalar_select %p26, %s28, %s19
      %p30 = scmp.ge.s32.totalorder %s29, 1
      %s31 = scalar_select %p30, 0, %s29
      %s32 = ssub.s32 %s19, %s31
      %p33 = scmp.eq.s32.totalorder %s32, 0
      %s35 = sadd.s32 %s34, 1
      %s36 = scalar_select %p33, %s34, %s35
      %p39 = pneg %p33
      %p40 = scmp.eq.s32.totalorder %s12, 1
      %p41 = por %p39, %p40
      %p42 = scmp.ne.s32.totalorder %s34, %s37
      %p43 = scmp.eq.s32.totalorder %s12, 0
      %p44 = por %p42, %p43
      %p45 = scmp.ne.s32.totalorder %s34, %s37
      %p46 = scmp.eq.s32.totalorder %s17, 1
      %p47 = por %p45, %p46
      %p48 = scmp.ne.s32.totalorder %s37, %s38
      %p49 = scmp.eq.s32.totalorder %s17, 0
      %p50 = por %p48, %p49
      %p51 = scmp.ne.s32.totalorder %s37, %s38
      %p52 = scmp.eq.s32.totalorder %s18, 1
      %p53 = por %p51, %p52
      %p55 = scmp.ne.s32.totalorder %s38, %s54
      %p56 = scmp.eq.s32.totalorder %s18, 0
      %p57 = por %p55, %p56
      %s59 = sadd.s32 %s58, 1
      %p62 = scmp.eq.s32.totalorder %s12, 1
      %p63 = scmp.ne.s32.totalorder %s58, %s60
      %p64 = scmp.eq.s32.totalorder %s12, 0
      %p65 = por %p63, %p64
      %p66 = scmp.ne.s32.totalorder %s58, %s60
      %p67 = scmp.eq.s32.totalorder %s17, 1
      %p68 = por %p66, %p67
      %p69 = scmp.ne.s32.totalorder %s60, %s61
      %p70 = scmp.eq.s32.totalorder %s17, 0
      %p71 = por %p69, %p70
      %p72 = scmp.ne.s32.totalorder %s60, %s61
      %p73 = scmp.eq.s32.totalorder %s18, 1
      %p74 = por %p72, %p73
      %p76 = scmp.ne.s32.totalorder %s61, %s75
      %p77 = scmp.eq.s32.totalorder %s18, 0
      %p78 = por %p76, %p77
      %s80 = sadd.s32 %s79, 1
      %p83 = scmp.eq.s32.totalorder %s12, 1
      %p84 = scmp.ne.s32.totalorder %s79, %s81
      %p85 = scmp.eq.s32.totalorder %s12, 0
      %p86 = por %p84, %p85
      %p87 = scmp.ne.s32.totalorder %s79, %s81
      %p88 = scmp.eq.s32.totalorder %s17, 1
      %p89 = por %p87, %p88
      %p90 = scmp.ne.s32.totalorder %s81, %s82
      %p91 = scmp.eq.s32.totalorder %s17, 0
      %p92 = por %p90, %p91
      %p93 = scmp.ne.s32.totalorder %s81, %s82
      %p94 = scmp.eq.s32.totalorder %s18, 1
      %p95 = por %p93, %p94
      %p97 = scmp.ne.s32.totalorder %s82, %s96
      %p98 = scmp.eq.s32.totalorder %s18, 0
      %p99 = por %p97, %p98
      %s100 = ssub.s32 %s19, %s31
      %p101 = scmp.eq.s32.totalorder %s100, 0
      %s103 = sadd.s32 %s102, 1
      %s104 = scalar_select %p101, %s102, %s103
      %p107 = pneg %p101
      %p108 = scmp.eq.s32.totalorder %s12, 1
      %p109 = por %p107, %p108
      %p110 = scmp.ne.s32.totalorder %s102, %s105
      %p111 = scmp.eq.s32.totalorder %s12, 0
      %p112 = por %p110, %p111
      %p113 = scmp.ne.s32.totalorder %s102, %s105
      %p114 = scmp.eq.s32.totalorder %s17, 1
      %p115 = por %p113, %p114
      %p116 = scmp.ne.s32.totalorder %s105, %s106
      %p117 = scmp.eq.s32.totalorder %s17, 0
      %p118 = por %p116, %p117
      %p119 = scmp.ne.s32.totalorder %s105, %s106
      %p120 = scmp.eq.s32.totalorder %s18, 1
      %p121 = por %p119, %p120
      %p123 = scmp.ne.s32.totalorder %s106, %s122
      %p124 = scmp.eq.s32.totalorder %s18, 0
      %p125 = por %p123, %p124
      %p126 = scmp.le.s32.totalorder 1, %s12
      %p127 = scmp.lt.s32.totalorder %s12, 3
      %p128 = pnand %p126, %p127
      %p129 = pneg %p128
      // Predicated region
      $region9: #{highway_forward.1} parent=5 // pred_check
        _
      $region10: #{highway_forward.1} parent=5 // pred_check_branch
        %131 = sbr.rel (%p128) target = $region12
      $region11: #{highway_forward.1} parent=5 // pred_region
        %s132 = ssub.s32 %s12, 1
        // Predicated region
        $region13: #{highway_forward.1} parent=11 // pred_check
          %p133 = pneg %p50
        $region14: #{highway_forward.1} parent=11 // pred_check_branch
          %135 = sbr.rel (%p133) target = $region16
        $region15: #{highway_forward.1} parent=11 // pred_region
          %s136 = smul.u32 2, %s21
          %138 = vsyncadd [#allocation3], 0
          %s139 = smul.addr %s136, 8
          %s140 = scalar_lea.hbm %s0, %s139
          %s141 = sshll.u32 %s140, 4
          %s142 = int_to_ptr.hbm [resolvable:$true] %s141
          %s143 = sshll.u32 [#allocation2], 4
          %s144 = int_to_ptr.vmem [resolvable:$true] %s143
          %149 = dma.hbm_to_vmem [thread:$0]  %s142, 256, %s144, [#allocation3], 128, 128, 8
        $region16: #{highway_forward.1} parent=11 // pred_fallthru
          _
        // Predicated region
        $region17: #{highway_forward.1} parent=11 // pred_check
          %p150 = pneg %p71
        $region18: #{highway_forward.1} parent=11 // pred_check_branch
          %152 = sbr.rel (%p150) target = $region20
        $region19: #{highway_forward.1} parent=11 // pred_region
          %154 = vsyncadd [#allocation6], 0
          %s155 = sshll.u32 %s1, 4
          %s156 = int_to_ptr.hbm [resolvable:$true] %s155
          %s157 = sshll.u32 [#allocation5], 4
          %s158 = int_to_ptr.vmem [resolvable:$true] %s157
          %163 = dma.hbm_to_vmem [thread:$0]  %s156, 1024, %s158, [#allocation6], 128, 128, 8
        $region20: #{highway_forward.1} parent=11 // pred_fallthru
          _
        // Predicated region
        $region21: #{highway_forward.1} parent=11 // pred_check
          %p164 = pneg %p92
        $region22: #{highway_forward.1} parent=11 // pred_check_branch
          %166 = sbr.rel (%p164) target = $region24
        $region23: #{highway_forward.1} parent=11 // pred_region
          _
        $region24: #{highway_forward.1} parent=11 // pred_fallthru
          _
      $region12: #{highway_forward.1} parent=5 // pred_fallthru
        _
      %p167 = scmp.lt.s32.totalorder %s12, 2
      // Predicated region
      $region25: #{highway_forward.1} parent=5 // pred_check
        %p168 = pneg %p167
      $region26: #{highway_forward.1} parent=5 // pred_check_branch
        %170 = sbr.rel (%p168) target = $region28
      $region27: #{highway_forward.1} parent=5 // pred_region
        _
      $region28: #{highway_forward.1} parent=5 // pred_fallthru
        _
      %p171 = scmp.le.s32.totalorder 1, %s12
      %p172 = scmp.lt.s32.totalorder %s12, 3
      %p173 = pnand %p171, %p172
      %p174 = pneg %p173
      // Predicated region
      $region29: #{highway_forward.1} parent=5 // pred_check
        _
      $region30: #{highway_forward.1} parent=5 // pred_check_branch
        %176 = sbr.rel (%p173) target = $region32
      $region31: #{highway_forward.1} parent=5 // pred_region
        %s177 = ssub.s32 %s12, 1
        // Predicated region
        $region33: #{highway_forward.1} parent=31 // pred_check
          %p178 = pneg %p50
        $region34: #{highway_forward.1} parent=31 // pred_check_branch
          %180 = sbr.rel (%p178) target = $region36
        $region35: #{highway_forward.1} parent=31 // pred_region
          %182 = dma.done [#allocation3], 256
        $region36: #{highway_forward.1} parent=31 // pred_fallthru
          _
        // Predicated region
        $region37: #{highway_forward.1} parent=31 // pred_check
          %p183 = pneg %p71
        $region38: #{highway_forward.1} parent=31 // pred_check_branch
          %185 = sbr.rel (%p183) target = $region40
        $region39: #{highway_forward.1} parent=31 // pred_region
          %187 = dma.done [#allocation6], 1024
        $region40: #{highway_forward.1} parent=31 // pred_fallthru
          _
        %p188 = pneg %p50
        %p189 = pneg %p47
        %p190 = pneg %p71
        %p191 = pneg %p68
        %p192 = pneg %p92
        %p193 = pneg %p89
        %p194 = pneg %p118
        %p195 = pneg %p115
        %s196 = smul.u32 2, %s21
        %s197 = smul.u32 2, %s21
        %p198 = scmp.eq.s32.totalorder %s22, 0
        // Predicated region
        $region41: #{highway_forward.1} parent=31 // pred_check
          %p199 = pneg %p198
        $region42: #{highway_forward.1} parent=31 // pred_check_branch
          %201 = sbr.rel (%p199) target = $region44
        $region43: #{highway_forward.1} parent=31 // pred_region
          %v202 = vld [vmem:[#allocation2] sm:$0xff]
          %v203 = vld [vmem:[#allocation2 + $0x8] sm:$0xff]
          %vm204 = vcmask 261120
          %205 = vst.msk [vmem:[#allocation7] sm:$0xff] %vm204, %v202
          %206 = vst.msk [vmem:[#allocation7 + $0x8] sm:$0xff] %vm204, %v203
        $region44: #{highway_forward.1} parent=31 // pred_fallthru
          _
        %v207 = vld [vmem:[#allocation7] sm:$0xff]
        %v208 = vld [vmem:[#allocation7 + $0x8] sm:$0xff]
        %s209 = smul.u32 %s22, 32
        %s210 = scalar_lea.vmem [#allocation5], %s209
        %v211 = vld [vmem:[%s210] sm:$0xff]
        %v212 = vld [vmem:[%s210 + $0x8] sm:$0xff]
        %v213 = vld [vmem:[%s210 + $0x10] sm:$0xff]
        %v214 = vld [vmem:[%s210 + $0x18] sm:$0xff]
        %s215 = scalar_lea.vmem %s2, %s22
        %v216 = vld [vmem:[%s215] sm:$0x1]
        %v218 = vperm.slane %v216, 0
        %vm220 = vcmask 261120
        %v222 = vsel %vm220, %v207, 0
        %v225 = vsel %vm220, %v208, 0
        %227 = vmatpush.msra.mxu0 0.0
        %228 = vmatpush.msra.mxu0 0.0
        %229 = vmatpush.msra.mxu0 0.0
        %230 = vmatpush.msra.mxu0 0.0
        %231 = vmatpush.msra.mxu0 0.0
        %232 = vmatpush.msra.mxu0 0.0
        %233 = vmatpush.msra.mxu0 0.0
        %234 = vmatpush.msra.mxu0 0.0
        %235 = vmatpush.msra.mxu0 0.0
        %236 = vmatpush.msra.mxu0 0.0
        %237 = vmatpush.msra.mxu0 0.0
        %238 = vmatpush.msra.mxu0 0.0
        %239 = vmatpush.msra.mxu0 %v214
        %240 = vmatpush.msra.mxu0 %v213
        %241 = vmatpush.msra.mxu0 %v212
        %242 = vmatpush.msra.mxu0 %v211
        %243 = vmatmul.f32.gmra.mxu0 %v222
        %v244 = vpop.f32.mrf.mxu0
        %v245 = vadd.f32 %v218, %v244
        %246 = vmatmul.f32.gmra.mxu0 %v225
        %v247 = vpop.f32.mrf.mxu0
        %v248 = vadd.f32 %v218, %v247
        %249 = vdwg.mxu0
        %v250 = vmax.f32 %v245, 0.0
        %v251 = vmax.f32 %v248, 0.0
        %v252 = vxor.u32 %v245, 2147483648
        %v253 = vxor.u32 %v248, 2147483648
        %v254 = vmul.f32 %v252, 1.442695
        %v255 = vpow.pop %v254
        %v256 = vmul.f32 %v253, 1.442695
        %v257 = vpow.pop %v256
        %v258 = vadd.f32 %v255, 1.0
        %v259 = vadd.f32 %v257, 1.0
        %v260 = vrcp.pop %v258
        %v261 = vmul.f32 %v258, %v260
        %v262 = vsub.f32 1.0, %v261
        %v263 = vmul.f32 %v260, %v262
        %v264 = vadd.f32 %v260, %v263
        %vm265 = vweird.f32 %v258
        %vm266 = vweird.f32 %v260
        %vm267 = vmor %vm265, %vm266
        %v268 = vsel %vm267, %v260, %v264
        %v269 = vand.u32 2147483647, %v258
        %vm270 = vcmp.eq.f32.partialorder %v269, 8.507059e+37
        %v271 = vand.u32 %v258, 2147483648
        %v272 = vor.u32 1.1754944e-38, %v271
        %v273 = vsel %vm270, %v272, %v268
        %v274 = vmul.f32 1.0, %v273
        %v275 = vrcp.pop %v259
        %v276 = vmul.f32 %v259, %v275
        %v277 = vsub.f32 1.0, %v276
        %v278 = vmul.f32 %v275, %v277
        %v279 = vadd.f32 %v275, %v278
        %vm280 = vweird.f32 %v259
        %vm281 = vweird.f32 %v275
        %vm282 = vmor %vm280, %vm281
        %v283 = vsel %vm282, %v275, %v279
        %v284 = vand.u32 2147483647, %v259
        %vm285 = vcmp.eq.f32.partialorder %v284, 8.507059e+37
        %v286 = vand.u32 %v259, 2147483648
        %v287 = vor.u32 1.1754944e-38, %v286
        %v288 = vsel %vm285, %v287, %v283
        %v289 = vmul.f32 1.0, %v288
        %v290 = vsub.f32 %v207, %v250
        %v291 = vsub.f32 %v208, %v251
        %294 = vrot.lane.b32.xlu0 %v290, 32
        %v295 = vpop.permute.xlu0 %294
        %296 = vrot.lane.b32.xlu0 %v291, 32
        %v297 = vpop.permute.xlu0 %296
        %v300 = vmul.f32 %v274, %v295
        %v301 = vmul.f32 %v289, %v297
        %304 = vrot.lane.b32.xlu0 %v300, 96
        %v305 = vpop.permute.xlu0 %304
        %306 = vrot.lane.b32.xlu0 %v301, 96
        %v307 = vpop.permute.xlu0 %306
        %v310 = vadd.f32 %v250, %v305
        %v311 = vadd.f32 %v251, %v307
        %312 = vst.msk [vmem:[#allocation7] sm:$0xff] %vm220, %v310
        %313 = vst.msk [vmem:[#allocation7 + $0x8] sm:$0xff] %vm220, %v311
        // Predicated region
        $region45: #{highway_forward.1} parent=31 // pred_check
          %p314 = pneg %p115
        $region46: #{highway_forward.1} parent=31 // pred_check_branch
          %316 = sbr.rel (%p314) target = $region48
        $region47: #{highway_forward.1} parent=31 // pred_region
          %s317 = smul.u32 2, %s21
          %319 = vsyncadd [#allocation4], 0
          %s320 = smul.addr %s317, 8
          %s321 = scalar_lea.hbm %s3, %s320
          %s322 = sshll.u32 [#allocation7], 4
          %s323 = int_to_ptr.vmem [resolvable:$true] %s322
          %s324 = sshll.u32 %s321, 4
          %s325 = int_to_ptr.hbm [resolvable:$true] %s324
          %330 = dma.vmem_to_hbm [thread:$0]  %s323, 256, %s325, [#allocation4], 128, 128, 8
        $region48: #{highway_forward.1} parent=31 // pred_fallthru
          _
        // Predicated region
        $region49: #{highway_forward.1} parent=31 // pred_check
          %p331 = pneg %p115
        $region50: #{highway_forward.1} parent=31 // pred_check_branch
          %333 = sbr.rel (%p331) target = $region52
        $region51: #{highway_forward.1} parent=31 // pred_region
          %335 = dma.done [#allocation4], 256
        $region52: #{highway_forward.1} parent=31 // pred_fallthru
          _
      $region32: #{highway_forward.1} parent=5 // pred_fallthru
        _
      %p336 = scmp.le.s32.totalorder 2, %s12
      // Predicated region
      $region53: #{highway_forward.1} parent=5 // pred_check
        %p337 = pneg %p336
      $region54: #{highway_forward.1} parent=5 // pred_check_branch
        %339 = sbr.rel (%p337) target = $region56
      $region55: #{highway_forward.1} parent=5 // pred_region
        %s340 = ssub.s32 %s12, 2
      $region56: #{highway_forward.1} parent=5 // pred_fallthru
        _
    $region6: #{highway_forward.1} parent=1 // loop_footer
      %s16 = sadd.s32 1, %s12
    $region7: #{highway_forward.1} parent=1 // loop_footer_branch
      %11 = sbr.rel target = $region3
    $region8: #{highway_forward.1} parent=1 // loop_exit
      _
    %341 = vsyncpa [#allocation3], 1
    %s342 = scalar_lea.sflag [#allocation3], 1
    %343 = vsyncpa %s342, 1
    %344 = vsyncpa [#allocation6], 1
    %345 = vsyncpa [#allocation4], 1
    %s346 = scalar_lea.sflag [#allocation4], 1
    %347 = vsyncpa %s346, 1

</llo_original>
